<compile_context>
chip_gen: v7x
topology: tpu7x:2x2x1
jax: 0.10.0
libtpu: 0.0.40
codegen_flags: <defaults>
</compile_context>

<pallas_src>
import functools

import jax
import jax.numpy as jnp
import numpy as np
from jax.experimental import pallas as pl
from jax.experimental.pallas import tpu as pltpu


def _sm_loss_kernel(gt_row_ref, gt_col_ref, m_ref, out_ref,
                    acc_sq, acc_a, acc_b, *, balanced: bool, n: int, tile_m: int):
    # gt_row_ref: (1, 1, N)      labels along columns (constant across row tiles)
    # gt_col_ref: (1, TILE_M, 1) labels for the rows of this tile
    # m_ref:      (1, TILE_M, N) similarity rows for this tile (native dtype)
    # out_ref:    (1, 1, 1)      per-batch loss (written at the last tile)
    # acc_*:      (1, 1) f32 VMEM accumulators persisting across the t axis
    t = pl.program_id(1)
    n_tiles = pl.num_programs(1)

    @pl.when(t == 0)
    def _init():
        acc_sq[...] = jnp.zeros_like(acc_sq)
        acc_a[...] = jnp.zeros_like(acc_a)
        acc_b[...] = jnp.zeros_like(acc_b)

    g_col = gt_row_ref[0].astype(jnp.float32)      # (1, N)
    g_row = gt_col_ref[0].astype(jnp.float32)      # (T, 1)
    m = m_ref[0].astype(jnp.float32)               # (T, N)

    sq = m * m
    # Column contractions against gt (lane reductions; ~3 VPU muls / element total).
    rs_m = jnp.sum(m * g_col, axis=-1, keepdims=True)      # (T, 1): sum_j gt_j M_ij
    rs_m2 = jnp.sum(sq * g_col, axis=-1, keepdims=True)    # (T, 1): sum_j gt_j M_ij^2

    # Diagonal of this row tile lives in columns [t*T, t*T + T): a (T, T) sub-block.
    if tile_m == n:
        db = m
    else:
        start = pl.multiple_of(t * tile_m, tile_m)          # 128-aligned by construction
        db = m_ref[0, :, pl.ds(start, tile_m)].astype(jnp.float32)   # (T, T)
    rr = jax.lax.broadcasted_iota(jnp.int32, (tile_m, tile_m), 0)
    cc = jax.lax.broadcasted_iota(jnp.int32, (tile_m, tile_m), 1)
    dvec = jnp.sum(jnp.where(rr == cc, db, 0.0), axis=-1, keepdims=True)  # (T, 1): M_ii

    acc_sq[...] += jnp.sum(sq, keepdims=True)
    acc_b[...] += jnp.sum(g_row * (rs_m - dvec), keepdims=True)            # masked sum of M
    acc_a[...] += jnp.sum(g_row * (rs_m2 - dvec * dvec), keepdims=True)    # masked sum of M^2

    @pl.when(t == n_tiles - 1)
    def _finalize():
        s = jnp.sum(g_col, keepdims=True)          # (1,1): number of inliers
        cnt_p = s * s - s                          # off-diagonal positive count
        sum_sq = acc_sq[...]
        a = acc_a[...]
        b = acc_b[...]
        if balanced:
            sum_p = a - 2.0 * b + cnt_p            # sum over gt_M of (M-1)^2
            sum_n = sum_sq - a                     # sum over (1-gt_M) of M^2
            cnt_n = jnp.float32(n * n) - cnt_p
            loss_p = sum_p / (jnp.maximum(cnt_p - 1.0, 0.0) + 1.0)
            loss_n = sum_n / (jnp.maximum(cnt_n - 1.0, 0.0) + 1.0)
            per_batch = 0.5 * loss_p + 0.5 * loss_n
        else:
            per_batch = sum_sq - 2.0 * b + cnt_p   # sum of (M - gt_M)^2; mean in wrapper
        out_ref[0] = per_batch.astype(out_ref.dtype)


def _choose_tile_rows(n: int) -> int:
    # Keep one (TILE_M, N) f32-equivalent tile around 4 MiB so that double-buffered
    # inputs plus f32 temporaries stay well under v7x's 64 MiB VMEM (and trivially
    # under v5e/v6e's 128 MiB), while still amortizing the ~0.35 us per-step cost.
    max_rows = max(8, (4 * 1024 * 1024) // (n * 4))
    if n <= max_rows:
        return n
    best = None
    cand = 128                      # keep the diag sub-block slice 128-lane aligned
    while cand <= max_rows:
        if n % cand == 0:
            best = cand
        cand += 128
    if best is not None:
        return best
    # TODO(synk): add a masked-tail path so huge N that has no multiple-of-128
    # divisor can still be row-tiled; for now fall back to one row tile per batch.
    return n


def spectral_matching_loss(M, gt_labels, balanced: bool = True):
    """M: [bs, N, N] similarity matrix (any float dtype), gt_labels: [bs, N] binary 0/1."""
    bs, n, n2 = M.shape
    assert n == n2
    gt = gt_labels.astype(jnp.float32)
    gt_row = gt.reshape(bs, 1, n)
    gt_col = gt.reshape(bs, n, 1)

    tile_m = _choose_tile_rows(n)
    n_tiles = n // tile_m

    kernel = functools.partial(_sm_loss_kernel, balanced=balanced, n=n, tile_m=tile_m)

    out = pl.pallas_call(
        kernel,
        out_shape=jax.ShapeDtypeStruct((bs, 1, 1), jnp.float32),
        grid_spec=pltpu.PrefetchScalarGridSpec(
            num_scalar_prefetch=0,
            grid=(bs, n_tiles),
            in_specs=[
                pl.BlockSpec((1, 1, n), lambda b, t: (b, 0, 0)),        # gt over columns
                pl.BlockSpec((1, tile_m, 1), lambda b, t: (b, t, 0)),   # gt for this row tile
                pl.BlockSpec((1, tile_m, n), lambda b, t: (b, t, 0)),   # M row tile (native dtype)
            ],
            out_specs=pl.BlockSpec((1, 1, 1), lambda b, t: (b, 0, 0)),
            scratch_shapes=[
                pltpu.VMEM((1, 1), jnp.float32),   # sum(M^2)
                pltpu.VMEM((1, 1), jnp.float32),   # masked sum(M^2)
                pltpu.VMEM((1, 1), jnp.float32),   # masked sum(M)
            ],
        ),
        compiler_params=pltpu.CompilerParams(
            dimension_semantics=("parallel", "arbitrary"),
            vmem_limit_bytes=48 * 1024 * 1024,
        ),
    )(gt_row, gt_col, M)

    per_batch = out[:, 0, 0]            # (bs,)
    if balanced:
        return jnp.mean(per_batch)
    return jnp.sum(per_batch) / jnp.float32(bs * n * n)


def _reference_loss(M, gt_labels, balanced: bool = True):
    # Pure-JAX reference mirroring the PyTorch module.
    M = M.astype(jnp.float32)
    gt = gt_labels.astype(jnp.float32)
    bs, n = gt.shape
    gt_m = ((gt[:, None, :] + gt[:, :, None]) == 2.0).astype(jnp.float32)
    eye = jnp.eye(n, dtype=jnp.float32)[None]
    gt_m = gt_m * (1.0 - eye)
    if balanced:
        p = ((M - 1.0) ** 2 * gt_m).sum((-1, -2)) / (
            jnp.maximum(gt_m.sum((-1, -2)) - 1.0, 0.0) + 1.0
        )
        nn_ = ((M ** 2) * (1.0 - gt_m)).sum((-1, -2)) / (
            jnp.maximum((1.0 - gt_m).sum((-1, -2)) - 1.0, 0.0) + 1.0
        )
        return jnp.mean(0.5 * p + 0.5 * nn_)
    return jnp.mean((M - gt_m) ** 2)


if __name__ == "__main__":
    key = jax.random.PRNGKey(0)
    k1, k2 = jax.random.split(key)

    bs, num_corr = 2, 128
    M = jax.random.normal(k1, (bs, num_corr, num_corr), dtype=jnp.float32)
    gt_labels = jax.random.bernoulli(k2, p=0.3, shape=(bs, num_corr)).astype(jnp.float32)

    for balanced in (True, False):
        loss = jax.block_until_ready(spectral_matching_loss(M, gt_labels, balanced=balanced))
        ref = jax.block_until_ready(_reference_loss(M, gt_labels, balanced=balanced))
        np.testing.assert_allclose(np.asarray(loss), np.asarray(ref), rtol=1e-4, atol=1e-5)

    print("KERNEL_OK")
</pallas_src>

<mosaic_0001>
module attributes {stable_mosaic.version = 11 : i64} {
  func.func @_sm_loss_kernel(%arg0: i32, %arg1: i32, %arg2: memref<1x1x128xf32, #tpu.memory_space<vmem>>, %arg3: memref<1x128x1xf32, #tpu.memory_space<vmem>>, %arg4: memref<1x128x128xf32, #tpu.memory_space<vmem>>, %arg5: memref<1x1x1xf32, #tpu.memory_space<vmem>>, %arg6: memref<1x1xf32, #tpu.memory_space<vmem>>, %arg7: memref<1x1xf32, #tpu.memory_space<vmem>>, %arg8: memref<1x1xf32, #tpu.memory_space<vmem>>) attributes {dimension_semantics = [#tpu.dimension_semantics<parallel>, #tpu.dimension_semantics<arbitrary>], iteration_bounds = array<i64: 2, 1>, scalar_prefetch = 0 : i64, scratch_operands = 3 : i64, tpu.core_type = #tpu.core_type<tc>, window_params = [{transform_indices = @transform_0, window_bounds = array<i64: 1, 1, 128>}, {transform_indices = @transform_1, window_bounds = array<i64: 1, 128, 1>}, {transform_indices = @transform_2, window_bounds = array<i64: 1, 128, 128>}, {transform_indices = @transform_3, window_bounds = array<i64: 1, 1, 1>}]} {
    %c0_i32 = arith.constant 0 : i32
    %0 = arith.cmpi eq, %arg1, %c0_i32 : i32
    %1 = arith.extui %0 : i1 to i32
    %c0_i32_0 = arith.constant 0 : i32
    %2 = arith.cmpi ne, %1, %c0_i32_0 : i32
    scf.if %2 {
      %cst_29 = arith.constant 0.000000e+00 : f32
      %57 = vector.broadcast %cst_29 : f32 to vector<1x1xf32>
      %c0_30 = arith.constant 0 : index
      %c0_31 = arith.constant 0 : index
      %58 = vector.load %arg6[%c0_30, %c0_31] : memref<1x1xf32, #tpu.memory_space<vmem>>, vector<1x1xf32>
      tpu.vector_store %arg6[%c0_30, %c0_31], %57 {strides = array<i32>} : memref<1x1xf32, #tpu.memory_space<vmem>>, vector<1x1xf32>,
      %cst_32 = arith.constant 0.000000e+00 : f32
      %59 = vector.broadcast %cst_32 : f32 to vector<1x1xf32>
      %c0_33 = arith.constant 0 : index
      %c0_34 = arith.constant 0 : index
      %60 = vector.load %arg7[%c0_33, %c0_34] : memref<1x1xf32, #tpu.memory_space<vmem>>, vector<1x1xf32>
      tpu.vector_store %arg7[%c0_33, %c0_34], %59 {strides = array<i32>} : memref<1x1xf32, #tpu.memory_space<vmem>>, vector<1x1xf32>,
      %cst_35 = arith.constant 0.000000e+00 : f32
      %61 = vector.broadcast %cst_35 : f32 to vector<1x1xf32>
      %c0_36 = arith.constant 0 : index
      %c0_37 = arith.constant 0 : index
      %62 = vector.load %arg8[%c0_36, %c0_37] : memref<1x1xf32, #tpu.memory_space<vmem>>, vector<1x1xf32>
      tpu.vector_store %arg8[%c0_36, %c0_37], %61 {strides = array<i32>} : memref<1x1xf32, #tpu.memory_space<vmem>>, vector<1x1xf32>,
    } else {
    }
    %c0 = arith.constant 0 : index
    %c0_1 = arith.constant 0 : index
    %c0_2 = arith.constant 0 : index
    %3 = vector.load %arg2[%c0, %c0_1, %c0_2] : memref<1x1x128xf32, #tpu.memory_space<vmem>>, vector<1x1x128xf32>
    %4 = vector.shape_cast %3 : vector<1x1x128xf32> to vector<1x128xf32>
    %c0_3 = arith.constant 0 : index
    %c0_4 = arith.constant 0 : index
    %c0_5 = arith.constant 0 : index
    %5 = vector.load %arg3[%c0_3, %c0_4, %c0_5] : memref<1x128x1xf32, #tpu.memory_space<vmem>>, vector<1x128x1xf32>
    %6 = vector.shape_cast %5 : vector<1x128x1xf32> to vector<128x1xf32>
    %c0_6 = arith.constant 0 : index
    %c0_7 = arith.constant 0 : index
    %c0_8 = arith.constant 0 : index
    %7 = vector.load %arg4[%c0_6, %c0_7, %c0_8] : memref<1x128x128xf32, #tpu.memory_space<vmem>>, vector<1x128x128xf32>
    %8 = vector.shape_cast %7 : vector<1x128x128xf32> to vector<128x128xf32>
    %9 = arith.mulf %8, %8 : vector<128x128xf32>
    %10 = vector.broadcast %4 : vector<1x128xf32> to vector<128x128xf32>
    %11 = arith.mulf %8, %10 : vector<128x128xf32>
    %cst = arith.constant dense<0.000000e+00> : vector<128xf32>
    %12 = vector.multi_reduction <add>, %11, %cst [1] : vector<128x128xf32> to vector<128xf32>
    %13 = vector.shape_cast %12 : vector<128xf32> to vector<128x1xf32>
    %14 = vector.broadcast %4 : vector<1x128xf32> to vector<128x128xf32>
    %15 = arith.mulf %9, %14 : vector<128x128xf32>
    %cst_9 = arith.constant dense<0.000000e+00> : vector<128xf32>
    %16 = vector.multi_reduction <add>, %15, %cst_9 [1] : vector<128x128xf32> to vector<128xf32>
    %17 = vector.shape_cast %16 : vector<128xf32> to vector<128x1xf32>
    %18 = tpu.iota {dimensions = array<i32: 0>} : vector<128x128xi32>
    %19 = tpu.iota {dimensions = array<i32: 1>} : vector<128x128xi32>
    %20 = arith.cmpi eq, %18, %19 : vector<128x128xi32>
    %cst_10 = arith.constant 0.000000e+00 : f32
    %21 = vector.broadcast %cst_10 : f32 to vector<128x128xf32>
    %22 = arith.select %20, %8, %21 : vector<128x128xi1>, vector<128x128xf32>
    %cst_11 = arith.constant dense<0.000000e+00> : vector<128xf32>
    %23 = vector.multi_reduction <add>, %22, %cst_11 [1] : vector<128x128xf32> to vector<128xf32>
    %24 = vector.shape_cast %23 : vector<128xf32> to vector<128x1xf32>
    %c0_12 = arith.constant 0 : index
    %c0_13 = arith.constant 0 : index
    %25 = vector.load %arg6[%c0_12, %c0_13] : memref<1x1xf32, #tpu.memory_space<vmem>>, vector<1x1xf32>
    %26 = vector.shape_cast %9 : vector<128x128xf32> to vector<1x128x128xf32>
    %cst_14 = arith.constant dense<0.000000e+00> : vector<1xf32>
    %27 = vector.multi_reduction <add>, %26, %cst_14 [1, 2] : vector<1x128x128xf32> to vector<1xf32>
    %28 = vector.shape_cast %27 : vector<1xf32> to vector<1x1x1xf32>
    %29 = vector.extract %28[0, 0, 0] : f32 from vector<1x1x1xf32>
    %30 = vector.broadcast %29 : f32 to vector<1x1xf32>
    %31 = arith.addf %25, %30 : vector<1x1xf32>
    %c0_15 = arith.constant 0 : index
    %c0_16 = arith.constant 0 : index
    %32 = vector.load %arg6[%c0_15, %c0_16] : memref<1x1xf32, #tpu.memory_space<vmem>>, vector<1x1xf32>
    tpu.vector_store %arg6[%c0_15, %c0_16], %31 {strides = array<i32>} : memref<1x1xf32, #tpu.memory_space<vmem>>, vector<1x1xf32>,
    %c0_17 = arith.constant 0 : index
    %c0_18 = arith.constant 0 : index
    %33 = vector.load %arg8[%c0_17, %c0_18] : memref<1x1xf32, #tpu.memory_space<vmem>>, vector<1x1xf32>
    %34 = arith.subf %13, %24 : vector<128x1xf32>
    %35 = arith.mulf %6, %34 : vector<128x1xf32>
    %36 = vector.shape_cast %35 : vector<128x1xf32> to vector<1x128x1xf32>
    %cst_19 = arith.constant dense<0.000000e+00> : vector<1xf32>
    %37 = vector.multi_reduction <add>, %36, %cst_19 [1, 2] : vector<1x128x1xf32> to vector<1xf32>
    %38 = vector.shape_cast %37 : vector<1xf32> to vector<1x1x1xf32>
    %39 = vector.extract %38[0, 0, 0] : f32 from vector<1x1x1xf32>
    %40 = vector.broadcast %39 : f32 to vector<1x1xf32>
    %41 = arith.addf %33, %40 : vector<1x1xf32>
    %c0_20 = arith.constant 0 : index
    %c0_21 = arith.constant 0 : index
    %42 = vector.load %arg8[%c0_20, %c0_21] : memref<1x1xf32, #tpu.memory_space<vmem>>, vector<1x1xf32>
    tpu.vector_store %arg8[%c0_20, %c0_21], %41 {strides = array<i32>} : memref<1x1xf32, #tpu.memory_space<vmem>>, vector<1x1xf32>,
    %c0_22 = arith.constant 0 : index
    %c0_23 = arith.constant 0 : index
    %43 = vector.load %arg7[%c0_22, %c0_23] : memref<1x1xf32, #tpu.memory_space<vmem>>, vector<1x1xf32>
    %44 = arith.mulf %24, %24 : vector<128x1xf32>
    %45 = arith.subf %17, %44 : vector<128x1xf32>
    %46 = arith.mulf %6, %45 : vector<128x1xf32>
    %47 = vector.shape_cast %46 : vector<128x1xf32> to vector<1x128x1xf32>
    %cst_24 = arith.constant dense<0.000000e+00> : vector<1xf32>
    %48 = vector.multi_reduction <add>, %47, %cst_24 [1, 2] : vector<1x128x1xf32> to vector<1xf32>
    %49 = vector.shape_cast %48 : vector<1xf32> to vector<1x1x1xf32>
    %50 = vector.extract %49[0, 0, 0] : f32 from vector<1x1x1xf32>
    %51 = vector.broadcast %50 : f32 to vector<1x1xf32>
    %52 = arith.addf %43, %51 : vector<1x1xf32>
    %c0_25 = arith.constant 0 : index
    %c0_26 = arith.constant 0 : index
    %53 = vector.load %arg7[%c0_25, %c0_26] : memref<1x1xf32, #tpu.memory_space<vmem>>, vector<1x1xf32>
    tpu.vector_store %arg7[%c0_25, %c0_26], %52 {strides = array<i32>} : memref<1x1xf32, #tpu.memory_space<vmem>>, vector<1x1xf32>,
    %c0_i32_27 = arith.constant 0 : i32
    %54 = arith.cmpi eq, %arg1, %c0_i32_27 : i32
    %55 = arith.extui %54 : i1 to i32
    %c0_i32_28 = arith.constant 0 : i32
    %56 = arith.cmpi ne, %55, %c0_i32_28 : i32
    scf.if %56 {
      %57 = vector.shape_cast %4 : vector<1x128xf32> to vector<1x1x128xf32>
      %cst_29 = arith.constant dense<0.000000e+00> : vector<1xf32>
      %58 = vector.multi_reduction <add>, %57, %cst_29 [1, 2] : vector<1x1x128xf32> to vector<1xf32>
      %59 = vector.shape_cast %58 : vector<1xf32> to vector<1x1x1xf32>
      %60 = vector.extract %59[0, 0, 0] : f32 from vector<1x1x1xf32>
      %61 = vector.broadcast %60 : f32 to vector<1x1xf32>
      %62 = arith.mulf %61, %61 : vector<1x1xf32>
      %63 = arith.subf %62, %61 : vector<1x1xf32>
      %c0_30 = arith.constant 0 : index
      %c0_31 = arith.constant 0 : index
      %64 = vector.load %arg6[%c0_30, %c0_31] : memref<1x1xf32, #tpu.memory_space<vmem>>, vector<1x1xf32>
      %c0_32 = arith.constant 0 : index
      %c0_33 = arith.constant 0 : index
      %65 = vector.load %arg7[%c0_32, %c0_33] : memref<1x1xf32, #tpu.memory_space<vmem>>, vector<1x1xf32>
      %c0_34 = arith.constant 0 : index
      %c0_35 = arith.constant 0 : index
      %66 = vector.load %arg8[%c0_34, %c0_35] : memref<1x1xf32, #tpu.memory_space<vmem>>, vector<1x1xf32>
      %cst_36 = arith.constant 2.000000e+00 : f32
      %67 = vector.broadcast %cst_36 : f32 to vector<1x1xf32>
      %68 = arith.mulf %67, %66 : vector<1x1xf32>
      %69 = arith.subf %65, %68 : vector<1x1xf32>
      %70 = arith.addf %69, %63 : vector<1x1xf32>
      %71 = arith.subf %64, %65 : vector<1x1xf32>
      %cst_37 = arith.constant 1.638400e+04 : f32
      %72 = vector.broadcast %cst_37 : f32 to vector<1x1xf32>
      %73 = arith.subf %72, %63 : vector<1x1xf32>
      %cst_38 = arith.constant 1.000000e+00 : f32
      %74 = vector.broadcast %cst_38 : f32 to vector<1x1xf32>
      %75 = arith.subf %63, %74 : vector<1x1xf32>
      %cst_39 = arith.constant 0.000000e+00 : f32
      %76 = vector.broadcast %cst_39 : f32 to vector<1x1xf32>
      %77 = arith.maximumf %75, %76 : vector<1x1xf32>
      %cst_40 = arith.constant 1.000000e+00 : f32
      %78 = vector.broadcast %cst_40 : f32 to vector<1x1xf32>
      %79 = arith.addf %77, %78 : vector<1x1xf32>
      %80 = arith.divf %70, %79 : vector<1x1xf32>
      %cst_41 = arith.constant 1.000000e+00 : f32
      %81 = vector.broadcast %cst_41 : f32 to vector<1x1xf32>
      %82 = arith.subf %73, %81 : vector<1x1xf32>
      %cst_42 = arith.constant 0.000000e+00 : f32
      %83 = vector.broadcast %cst_42 : f32 to vector<1x1xf32>
      %84 = arith.maximumf %82, %83 : vector<1x1xf32>
      %cst_43 = arith.constant 1.000000e+00 : f32
      %85 = vector.broadcast %cst_43 : f32 to vector<1x1xf32>
      %86 = arith.addf %84, %85 : vector<1x1xf32>
      %87 = arith.divf %71, %86 : vector<1x1xf32>
      %cst_44 = arith.constant 5.000000e-01 : f32
      %88 = vector.broadcast %cst_44 : f32 to vector<1x1xf32>
      %89 = arith.mulf %88, %80 : vector<1x1xf32>
      %cst_45 = arith.constant 5.000000e-01 : f32
      %90 = vector.broadcast %cst_45 : f32 to vector<1x1xf32>
      %91 = arith.mulf %90, %87 : vector<1x1xf32>
      %92 = arith.addf %89, %91 : vector<1x1xf32>
      %c0_46 = arith.constant 0 : index
      %c0_47 = arith.constant 0 : index
      %c0_48 = arith.constant 0 : index
      %93 = vector.load %arg5[%c0_46, %c0_47, %c0_48] : memref<1x1x1xf32, #tpu.memory_space<vmem>>, vector<1x1x1xf32>
      %94 = vector.shape_cast %93 : vector<1x1x1xf32> to vector<1x1xf32>
      %95 = vector.shape_cast %92 : vector<1x1xf32> to vector<1x1x1xf32>
      tpu.vector_store %arg5[%c0_46, %c0_47, %c0_48], %95 {strides = array<i32>} : memref<1x1x1xf32, #tpu.memory_space<vmem>>, vector<1x1x1xf32>,
    } else {
    }
    return
  }
  func.func @transform_0(%arg0: i32, %arg1: i32) -> (i32, i32, i32) {
    %c0_i32 = arith.constant 0 : i32
    %c0_i32_0 = arith.constant 0 : i32
    %c0_i32_1 = arith.constant 0 : i32
    return %arg0, %c0_i32, %c0_i32_0 : i32, i32, i32
  }
  func.func @transform_1(%arg0: i32, %arg1: i32) -> (i32, i32, i32) {
    %c0_i32 = arith.constant 0 : i32
    %c0_i32_0 = arith.constant 0 : i32
    return %arg0, %arg1, %c0_i32 : i32, i32, i32
  }
  func.func @transform_2(%arg0: i32, %arg1: i32) -> (i32, i32, i32) {
    %c0_i32 = arith.constant 0 : i32
    %c0_i32_0 = arith.constant 0 : i32
    return %arg0, %arg1, %c0_i32 : i32, i32, i32
  }
  func.func @transform_3(%arg0: i32, %arg1: i32) -> (i32, i32, i32) {
    %c0_i32 = arith.constant 0 : i32
    %c0_i32_0 = arith.constant 0 : i32
    %c0_i32_1 = arith.constant 0 : i32
    return %arg0, %c0_i32, %c0_i32_0 : i32, i32, i32
  }
}

</mosaic_0001>

<llo_original>
// kernel: tpu_custom_call.1
$region0: #{tpu_custom_call.1}
  #allocation0 [shape = 'u32[]', space=smem, size = 0x4, offset = 0x4, fixed_abs, tag = 'smem constant byte address 0x4 - core index']
  #allocation1 [shape = 'u32[144,128]{1,0:T(1,128)}', space=vmem, size = 0x12000, scoped, tag = 'internal scratch']
  #allocation2 [shape = 'f32[1,1]{1,0:T(1,128)}', space=vmem, size = 0x200, scoped, tag = 'scratch operand']
  #allocation3 [shape = 'f32[1,1]{1,0:T(1,128)}', space=vmem, size = 0x200, scoped, tag = 'scratch operand']
  #allocation4 [shape = 'f32[1,1]{1,0:T(1,128)}', space=vmem, size = 0x200, scoped, tag = 'scratch operand']
  %s0 = inlined_call_operand.vmem [shape: f32[2,1,128], index: 0, kind: input, shape index: {}]
  %s1 = inlined_call_operand.vmem [shape: f32[2,128,1], index: 1, kind: input, shape index: {}]
  %s2 = inlined_call_operand.vmem [shape: f32[2,128,128], index: 2, kind: input, shape index: {}]
  %s3 = inlined_call_operand.vmem [shape: f32[2,1,1], index: 3, kind: output, shape index: {}]
  %s4 = sld [smem:[#allocation0]]
  $region53: #{tpu_custom_call.1} parent=0
    _
  %s6 = ssub.s32 1, %s4
  %s7 = scalar_select 0, %s6, %s4
  loop: start=0, step=1, limit=4
  $region2: #{tpu_custom_call.1} parent=0 // loop_pre_header
    _
  $region3: #{tpu_custom_call.1} parent=0 // loop_header
    %s9 = sphi 0, %s13
    %p10 = scmp.ge.s32.totalorder %s9, 4
    %s16 = sphi 0, %s28
    %s17 = sphi 0, %s24
    %s18 = sphi 0, %s16
    %s19 = sphi 0, %s17
    %s20 = sphi 0, %s18
    %s21 = sphi 0, %s19
    %s31 = sphi 0, %s33
    %s34 = sphi 0, %s31
    %s35 = sphi 0, %s34
    %s51 = sphi 0, %s35
    %s59 = sphi 0, %s61
    %s62 = sphi 0, %s59
    %s63 = sphi 0, %s62
    %s79 = sphi 0, %s63
    %s87 = sphi 0, %s89
    %s90 = sphi 0, %s87
    %s91 = sphi 0, %s90
    %s107 = sphi 0, %s91
    %s113 = sphi 0, %s115
    %s116 = sphi 0, %s113
    %s117 = sphi 0, %s116
    %s133 = sphi 0, %s117
  $region4: #{tpu_custom_call.1} parent=0 // loop_header_branch
    %12 = sbr.rel (%p10) target = $region8
  $region5: #{tpu_custom_call.1} parent=0 // loop_body
    %s14 = ssub.s32 %s9, 1
    %s15 = ssub.s32 %s9, 2
    %s22 = sadd.s32 1, %s17
    %p23 = scmp.ge.s32.totalorder %s22, 1
    %s24 = scalar_select %p23, 0, %s22
    %s25 = sadd.s32 1, %s16
    %s26 = scalar_select %p23, %s25, %s16
    %p27 = scmp.ge.s32.totalorder %s26, 2
    %s28 = scalar_select %p27, 0, %s26
    %s29 = ssub.s32 %s16, %s28
    %p30 = scmp.eq.s32.totalorder %s29, 0
    %s32 = sadd.s32 %s31, 1
    %s33 = scalar_select %p30, %s31, %s32
    %p36 = pneg %p30
    %p37 = scmp.eq.s32.totalorder %s9, 1
    %p38 = por %p36, %p37
    %p39 = scmp.ne.s32.totalorder %s31, %s34
    %p40 = scmp.eq.s32.totalorder %s9, 0
    %p41 = por %p39, %p40
    %p42 = scmp.ne.s32.totalorder %s31, %s34
    %p43 = scmp.eq.s32.totalorder %s14, 1
    %p44 = por %p42, %p43
    %p45 = scmp.ne.s32.totalorder %s34, %s35
    %p46 = scmp.eq.s32.totalorder %s14, 0
    %p47 = por %p45, %p46
    %p48 = scmp.ne.s32.totalorder %s34, %s35
    %p49 = scmp.eq.s32.totalorder %s15, 1
    %p50 = por %p48, %p49
    %p52 = scmp.ne.s32.totalorder %s35, %s51
    %p53 = scmp.eq.s32.totalorder %s15, 0
    %p54 = por %p52, %p53
    %s55 = ssub.s32 %s16, %s28
    %s56 = ssub.s32 %s17, %s24
    %s57 = sor.u32 %s55, %s56
    %p58 = scmp.eq.s32.totalorder %s57, 0
    %s60 = sadd.s32 %s59, 1
    %s61 = scalar_select %p58, %s59, %s60
    %p64 = pneg %p58
    %p65 = scmp.eq.s32.totalorder %s9, 1
    %p66 = por %p64, %p65
    %p67 = scmp.ne.s32.totalorder %s59, %s62
    %p68 = scmp.eq.s32.totalorder %s9, 0
    %p69 = por %p67, %p68
    %p70 = scmp.ne.s32.totalorder %s59, %s62
    %p71 = scmp.eq.s32.totalorder %s14, 1
    %p72 = por %p70, %p71
    %p73 = scmp.ne.s32.totalorder %s62, %s63
    %p74 = scmp.eq.s32.totalorder %s14, 0
    %p75 = por %p73, %p74
    %p76 = scmp.ne.s32.totalorder %s62, %s63
    %p77 = scmp.eq.s32.totalorder %s15, 1
    %p78 = por %p76, %p77
    %p80 = scmp.ne.s32.totalorder %s63, %s79
    %p81 = scmp.eq.s32.totalorder %s15, 0
    %p82 = por %p80, %p81
    %s83 = ssub.s32 %s16, %s28
    %s84 = ssub.s32 %s17, %s24
    %s85 = sor.u32 %s83, %s84
    %p86 = scmp.eq.s32.totalorder %s85, 0
    %s88 = sadd.s32 %s87, 1
    %s89 = scalar_select %p86, %s87, %s88
    %p92 = pneg %p86
    %p93 = scmp.eq.s32.totalorder %s9, 1
    %p94 = por %p92, %p93
    %p95 = scmp.ne.s32.totalorder %s87, %s90
    %p96 = scmp.eq.s32.totalorder %s9, 0
    %p97 = por %p95, %p96
    %p98 = scmp.ne.s32.totalorder %s87, %s90
    %p99 = scmp.eq.s32.totalorder %s14, 1
    %p100 = por %p98, %p99
    %p101 = scmp.ne.s32.totalorder %s90, %s91
    %p102 = scmp.eq.s32.totalorder %s14, 0
    %p103 = por %p101, %p102
    %p104 = scmp.ne.s32.totalorder %s90, %s91
    %p105 = scmp.eq.s32.totalorder %s15, 1
    %p106 = por %p104, %p105
    %p108 = scmp.ne.s32.totalorder %s91, %s107
    %p109 = scmp.eq.s32.totalorder %s15, 0
    %p110 = por %p108, %p109
    %s111 = ssub.s32 %s16, %s28
    %p112 = scmp.eq.s32.totalorder %s111, 0
    %s114 = sadd.s32 %s113, 1
    %s115 = scalar_select %p112, %s113, %s114
    %p118 = pneg %p112
    %p119 = scmp.eq.s32.totalorder %s9, 1
    %p120 = por %p118, %p119
    %p121 = scmp.ne.s32.totalorder %s113, %s116
    %p122 = scmp.eq.s32.totalorder %s9, 0
    %p123 = por %p121, %p122
    %p124 = scmp.ne.s32.totalorder %s113, %s116
    %p125 = scmp.eq.s32.totalorder %s14, 1
    %p126 = por %p124, %p125
    %p127 = scmp.ne.s32.totalorder %s116, %s117
    %p128 = scmp.eq.s32.totalorder %s14, 0
    %p129 = por %p127, %p128
    %p130 = scmp.ne.s32.totalorder %s116, %s117
    %p131 = scmp.eq.s32.totalorder %s15, 1
    %p132 = por %p130, %p131
    %p134 = scmp.ne.s32.totalorder %s117, %s133
    %p135 = scmp.eq.s32.totalorder %s15, 0
    %p136 = por %p134, %p135
    %p137 = scmp.le.s32.totalorder 1, %s9
    %p138 = scmp.lt.s32.totalorder %s9, 3
    %p139 = pnand %p137, %p138
    %p140 = pneg %p139
    // Predicated region
    $region9: #{tpu_custom_call.1} parent=5 // pred_check
      _
    $region10: #{tpu_custom_call.1} parent=5 // pred_check_branch
      %142 = sbr.rel (%p139) target = $region12
    $region11: #{tpu_custom_call.1} parent=5 // pred_region
      %s143 = ssub.s32 %s9, 1
    $region12: #{tpu_custom_call.1} parent=5 // pred_fallthru
      _
    %p144 = scmp.lt.s32.totalorder %s9, 2
    // Predicated region
    $region13: #{tpu_custom_call.1} parent=5 // pred_check
      %p145 = pneg %p144
    $region14: #{tpu_custom_call.1} parent=5 // pred_check_branch
      %147 = sbr.rel (%p145) target = $region16
    $region15: #{tpu_custom_call.1} parent=5 // pred_region
      // Predicated region
      $region17: #{tpu_custom_call.1} parent=15 // pred_check
        %p148 = pneg %p41
      $region18: #{tpu_custom_call.1} parent=15 // pred_check_branch
        %150 = sbr.rel (%p148) target = $region20
      $region19: #{tpu_custom_call.1} parent=15 // pred_region
        %p151 = scmp.lt.s32.totalorder %s16, 1
        %s152 = scalar_select %p151, %s16, 1
        %s153 = scalar_lea.vmem %s0, %s152
      $region20: #{tpu_custom_call.1} parent=15 // pred_fallthru
        _
      // Predicated region
      $region21: #{tpu_custom_call.1} parent=15 // pred_check
        %p154 = pneg %p69
      $region22: #{tpu_custom_call.1} parent=15 // pred_check_branch
        %156 = sbr.rel (%p154) target = $region24
      $region23: #{tpu_custom_call.1} parent=15 // pred_region
        %s157 = smul.u32 16, %s17
        %p158 = scmp.lt.s32.totalorder %s16, 1
        %s159 = scalar_select %p158, %s16, 1
        %p160 = scmp.lt.s32.totalorder %s157, 15
        %s161 = scalar_select %p160, %s157, 15
        %s162 = smul.addr %s159, 16
        %s163 = sadd.s32 %s161, %s162
        %s164 = smul.addr %s163, 8
        %s165 = scalar_lea.vmem %s1, %s164
        %s166 = smul.u32 16, %s17
      $region24: #{tpu_custom_call.1} parent=15 // pred_fallthru
        _
      // Predicated region
      $region25: #{tpu_custom_call.1} parent=15 // pred_check
        %p167 = pneg %p97
      $region26: #{tpu_custom_call.1} parent=15 // pred_check_branch
        %169 = sbr.rel (%p167) target = $region28
      $region27: #{tpu_custom_call.1} parent=15 // pred_region
        %s170 = smul.u32 16, %s17
        %p171 = scmp.lt.s32.totalorder %s16, 1
        %s172 = scalar_select %p171, %s16, 1
        %p173 = scmp.lt.s32.totalorder %s170, 15
        %s174 = scalar_select %p173, %s170, 15
        %s175 = smul.addr %s172, 16
        %s176 = sadd.s32 %s174, %s175
        %s177 = smul.addr %s176, 8
        %s178 = scalar_lea.vmem %s2, %s177
        %s179 = smul.u32 16, %s17
      $region28: #{tpu_custom_call.1} parent=15 // pred_fallthru
        _
    $region16: #{tpu_custom_call.1} parent=5 // pred_fallthru
      _
    %p180 = scmp.le.s32.totalorder 1, %s9
    %p181 = scmp.lt.s32.totalorder %s9, 3
    %p182 = pnand %p180, %p181
    %p183 = pneg %p182
    // Predicated region
    $region29: #{tpu_custom_call.1} parent=5 // pred_check
      _
    $region30: #{tpu_custom_call.1} parent=5 // pred_check_branch
      %185 = sbr.rel (%p182) target = $region32
    $region31: #{tpu_custom_call.1} parent=5 // pred_region
      %s186 = ssub.s32 %s9, 1
      %p187 = scmp.lt.s32.totalorder %s18, 1
      %s188 = scalar_select %p187, %s18, 1
      %s189 = scalar_lea.vmem %s0, %s188
      %p190 = pneg %p47
      %p191 = pneg %p44
      %s192 = smul.u32 16, %s19
      %p193 = scmp.lt.s32.totalorder %s18, 1
      %s194 = scalar_select %p193, %s18, 1
      %p195 = scmp.lt.s32.totalorder %s192, 15
      %s196 = scalar_select %p195, %s192, 15
      %s197 = smul.addr %s194, 16
      %s198 = sadd.s32 %s196, %s197
      %s199 = smul.addr %s198, 8
      %s200 = scalar_lea.vmem %s1, %s199
      %p201 = pneg %p75
      %p202 = pneg %p72
      %s203 = smul.u32 16, %s19
      %p204 = scmp.lt.s32.totalorder %s18, 1
      %s205 = scalar_select %p204, %s18, 1
      %p206 = scmp.lt.s32.totalorder %s203, 15
      %s207 = scalar_select %p206, %s203, 15
      %s208 = smul.addr %s205, 16
      %s209 = sadd.s32 %s207, %s208
      %s210 = smul.addr %s209, 8
      %s211 = scalar_lea.vmem %s2, %s210
      %p212 = pneg %p103
      %p213 = pneg %p100
      %p214 = pneg %p129
      %p215 = pneg %p126
      %p216 = scmp.lt.s32.totalorder %s18, 1
      %s217 = scalar_select %p216, %s18, 1
      %s218 = scalar_lea.vmem %s3, %s217
      %p219 = scmp.lt.s32.totalorder %s18, 1
      %s220 = scalar_select %p219, %s18, 1
      %s221 = scalar_lea.vmem %s0, %s220
      %s222 = smul.u32 16, %s19
      %p223 = scmp.lt.s32.totalorder %s18, 1
      %s224 = scalar_select %p223, %s18, 1
      %p225 = scmp.lt.s32.totalorder %s222, 15
      %s226 = scalar_select %p225, %s222, 15
      %s227 = smul.addr %s224, 16
      %s228 = sadd.s32 %s226, %s227
      %s229 = smul.addr %s228, 8
      %s230 = scalar_lea.vmem %s1, %s229
      %s231 = smul.u32 16, %s19
      %s232 = smul.u32 16, %s19
      %p233 = scmp.lt.s32.totalorder %s18, 1
      %s234 = scalar_select %p233, %s18, 1
      %p235 = scmp.lt.s32.totalorder %s232, 15
      %s236 = scalar_select %p235, %s232, 15
      %s237 = smul.addr %s234, 16
      %s238 = sadd.s32 %s236, %s237
      %s239 = smul.addr %s238, 8
      %s240 = scalar_lea.vmem %s2, %s239
      %s241 = smul.u32 16, %s19
      %p242 = scmp.lt.s32.totalorder %s18, 1
      %s243 = scalar_select %p242, %s18, 1
      %s244 = scalar_lea.vmem %s3, %s243
      %p245 = scmp.eq.s32.totalorder %s19, 0
      // Predicated region
      $region33: #{tpu_custom_call.1} parent=31 // pred_check
        %p246 = pneg %p245
      $region34: #{tpu_custom_call.1} parent=31 // pred_check_branch
        %248 = sbr.rel (%p246) target = $region36
      $region35: #{tpu_custom_call.1} parent=31 // pred_region
        %vm249 = vcmask 0
        %250 = vst.msk [vmem:[#allocation2] sm:$0x1] %vm249, 0.0
        %251 = vst.msk [vmem:[#allocation3] sm:$0x1] %vm249, 0.0
        %252 = vst.msk [vmem:[#allocation4] sm:$0x1] %vm249, 0.0
      $region36: #{tpu_custom_call.1} parent=31 // pred_fallthru
        _
      %v253 = vld [vmem:[%s221] sm:$0x1]
      %v254 = vld [vmem:[%s230] sm:$0xff]
      %v255 = vld [vmem:[%s230 + $0x8] sm:$0xff]
      %v256 = vld [vmem:[%s230 + $0x10] sm:$0xff]
      %v257 = vld [vmem:[%s230 + $0x18] sm:$0xff]
      %v258 = vld [vmem:[%s230 + $0x20] sm:$0xff]
      %v259 = vld [vmem:[%s230 + $0x28] sm:$0xff]
      %v260 = vld [vmem:[%s230 + $0x30] sm:$0xff]
      %v261 = vld [vmem:[%s230 + $0x38] sm:$0xff]
      %v262 = vld [vmem:[%s230 + $0x40] sm:$0xff]
      %v263 = vld [vmem:[%s230 + $0x48] sm:$0xff]
      %v264 = vld [vmem:[%s230 + $0x50] sm:$0xff]
      %v265 = vld [vmem:[%s230 + $0x58] sm:$0xff]
      %v266 = vld [vmem:[%s230 + $0x60] sm:$0xff]
      %v267 = vld [vmem:[%s230 + $0x68] sm:$0xff]
      %v268 = vld [vmem:[%s230 + $0x70] sm:$0xff]
      %v269 = vld [vmem:[%s230 + $0x78] sm:$0xff]
      %v270 = vld [vmem:[%s240] sm:$0xff]
      %v271 = vld [vmem:[%s240 + $0x8] sm:$0xff]
      %v272 = vld [vmem:[%s240 + $0x10] sm:$0xff]
      %v273 = vld [vmem:[%s240 + $0x18] sm:$0xff]
      %v274 = vld [vmem:[%s240 + $0x20] sm:$0xff]
      %v275 = vld [vmem:[%s240 + $0x28] sm:$0xff]
      %v276 = vld [vmem:[%s240 + $0x30] sm:$0xff]
      %v277 = vld [vmem:[%s240 + $0x38] sm:$0xff]
      %v278 = vld [vmem:[%s240 + $0x40] sm:$0xff]
      %v279 = vld [vmem:[%s240 + $0x48] sm:$0xff]
      %v280 = vld [vmem:[%s240 + $0x50] sm:$0xff]
      %v281 = vld [vmem:[%s240 + $0x58] sm:$0xff]
      %v282 = vld [vmem:[%s240 + $0x60] sm:$0xff]
      %v283 = vld [vmem:[%s240 + $0x68] sm:$0xff]
      %v284 = vld [vmem:[%s240 + $0x70] sm:$0xff]
      %v285 = vld [vmem:[%s240 + $0x78] sm:$0xff]
      %v286 = vmul.f32 %v270, %v270
      %v287 = vmul.f32 %v271, %v271
      %v288 = vmul.f32 %v272, %v272
      %v289 = vmul.f32 %v273, %v273
      %v290 = vmul.f32 %v274, %v274
      %v291 = vmul.f32 %v275, %v275
      %v292 = vmul.f32 %v276, %v276
      %v293 = vmul.f32 %v277, %v277
      %v294 = vmul.f32 %v278, %v278
      %v295 = vmul.f32 %v279, %v279
      %v296 = vmul.f32 %v280, %v280
      %v297 = vmul.f32 %v281, %v281
      %v298 = vmul.f32 %v282, %v282
      %v299 = vmul.f32 %v283, %v283
      %v300 = vmul.f32 %v284, %v284
      %v301 = vmul.f32 %v285, %v285
      %v303 = vlaneseq
      %v304 = vshrl.u32 %v303, 7
      %v305 = vsub.s32 0, %v304
      %v306 = vrot.slane %v253, %v305
      %v308 = vmul.f32 %v270, %v306
      %v309 = vmul.f32 %v271, %v306
      %v310 = vmul.f32 %v272, %v306
      %v311 = vmul.f32 %v273, %v306
      %v312 = vmul.f32 %v274, %v306
      %v313 = vmul.f32 %v275, %v306
      %v314 = vmul.f32 %v276, %v306
      %v315 = vmul.f32 %v277, %v306
      %v316 = vmul.f32 %v278, %v306
      %v317 = vmul.f32 %v279, %v306
      %v318 = vmul.f32 %v280, %v306
      %v319 = vmul.f32 %v281, %v306
      %v320 = vmul.f32 %v282, %v306
      %v321 = vmul.f32 %v283, %v306
      %v322 = vmul.f32 %v284, %v306
      %v323 = vmul.f32 %v285, %v306
      %324 = vadd.xlane.f32.xlu0 %v308
      %v325 = vpop.xlane.xlu0 %324
      %326 = vadd.xlane.f32.xlu0 %v309
      %v327 = vpop.xlane.xlu0 %326
      %328 = vadd.xlane.f32.xlu0 %v310
      %v329 = vpop.xlane.xlu0 %328
      %330 = vadd.xlane.f32.xlu0 %v311
      %v331 = vpop.xlane.xlu0 %330
      %332 = vadd.xlane.f32.xlu0 %v312
      %v333 = vpop.xlane.xlu0 %332
      %334 = vadd.xlane.f32.xlu0 %v313
      %v335 = vpop.xlane.xlu0 %334
      %336 = vadd.xlane.f32.xlu0 %v314
      %v337 = vpop.xlane.xlu0 %336
      %338 = vadd.xlane.f32.xlu0 %v315
      %v339 = vpop.xlane.xlu0 %338
      %340 = vadd.xlane.f32.xlu0 %v316
      %v341 = vpop.xlane.xlu0 %340
      %342 = vadd.xlane.f32.xlu0 %v317
      %v343 = vpop.xlane.xlu0 %342
      %344 = vadd.xlane.f32.xlu0 %v318
      %v345 = vpop.xlane.xlu0 %344
      %346 = vadd.xlane.f32.xlu0 %v319
      %v347 = vpop.xlane.xlu0 %346
      %348 = vadd.xlane.f32.xlu0 %v320
      %v349 = vpop.xlane.xlu0 %348
      %350 = vadd.xlane.f32.xlu0 %v321
      %v351 = vpop.xlane.xlu0 %350
      %352 = vadd.xlane.f32.xlu0 %v322
      %v353 = vpop.xlane.xlu0 %352
      %354 = vadd.xlane.f32.xlu0 %v323
      %v355 = vpop.xlane.xlu0 %354
      %v356 = vmul.f32 %v286, %v306
      %v357 = vmul.f32 %v287, %v306
      %v358 = vmul.f32 %v288, %v306
      %v359 = vmul.f32 %v289, %v306
      %v360 = vmul.f32 %v290, %v306
      %v361 = vmul.f32 %v291, %v306
      %v362 = vmul.f32 %v292, %v306
      %v363 = vmul.f32 %v293, %v306
      %v364 = vmul.f32 %v294, %v306
      %v365 = vmul.f32 %v295, %v306
      %v366 = vmul.f32 %v296, %v306
      %v367 = vmul.f32 %v297, %v306
      %v368 = vmul.f32 %v298, %v306
      %v369 = vmul.f32 %v299, %v306
      %v370 = vmul.f32 %v300, %v306
      %v371 = vmul.f32 %v301, %v306
      %372 = vadd.xlane.f32.xlu0 %v356
      %v373 = vpop.xlane.xlu0 %372
      %374 = vadd.xlane.f32.xlu0 %v357
      %v375 = vpop.xlane.xlu0 %374
      %376 = vadd.xlane.f32.xlu0 %v358
      %v377 = vpop.xlane.xlu0 %376
      %378 = vadd.xlane.f32.xlu0 %v359
      %v379 = vpop.xlane.xlu0 %378
      %380 = vadd.xlane.f32.xlu0 %v360
      %v381 = vpop.xlane.xlu0 %380
      %382 = vadd.xlane.f32.xlu0 %v361
      %v383 = vpop.xlane.xlu0 %382
      %384 = vadd.xlane.f32.xlu0 %v362
      %v385 = vpop.xlane.xlu0 %384
      %386 = vadd.xlane.f32.xlu0 %v363
      %v387 = vpop.xlane.xlu0 %386
      %388 = vadd.xlane.f32.xlu0 %v364
      %v389 = vpop.xlane.xlu0 %388
      %390 = vadd.xlane.f32.xlu0 %v365
      %v391 = vpop.xlane.xlu0 %390
      %392 = vadd.xlane.f32.xlu0 %v366
      %v393 = vpop.xlane.xlu0 %392
      %394 = vadd.xlane.f32.xlu0 %v367
      %v395 = vpop.xlane.xlu0 %394
      %396 = vadd.xlane.f32.xlu0 %v368
      %v397 = vpop.xlane.xlu0 %396
      %398 = vadd.xlane.f32.xlu0 %v369
      %v399 = vpop.xlane.xlu0 %398
      %400 = vadd.xlane.f32.xlu0 %v370
      %v401 = vpop.xlane.xlu0 %400
      %402 = vadd.xlane.f32.xlu0 %v371
      %v403 = vpop.xlane.xlu0 %402
      %v404 = vlaneseq
      %v405 = vshrl.u32 %v404, 7
      %v406 = vadd.s32 %v405, 8
      %v407 = vadd.s32 %v405, 16
      %v408 = vadd.s32 %v405, 24
      %v409 = vadd.s32 %v405, 32
      %v410 = vadd.s32 %v405, 40
      %v411 = vadd.s32 %v405, 48
      %v412 = vadd.s32 %v405, 56
      %v413 = vadd.s32 %v405, 64
      %v414 = vadd.s32 %v405, 72
      %v415 = vadd.s32 %v405, 80
      %v416 = vadd.s32 %v405, 88
      %v417 = vadd.s32 %v405, 96
      %v418 = vadd.s32 %v405, 104
      %v419 = vadd.s32 %v405, 112
      %v420 = vadd.s32 %v405, 120
      %v421 = vlaneseq
      %v422 = vand.u32 %v421, 127
      %vm423 = vcmp.eq.s32.totalorder %v405, %v422
      %vm424 = vcmp.eq.s32.totalorder %v406, %v422
      %vm425 = vcmp.eq.s32.totalorder %v407, %v422
      %vm426 = vcmp.eq.s32.totalorder %v408, %v422
      %vm427 = vcmp.eq.s32.totalorder %v409, %v422
      %vm428 = vcmp.eq.s32.totalorder %v410, %v422
      %vm429 = vcmp.eq.s32.totalorder %v411, %v422
      %vm430 = vcmp.eq.s32.totalorder %v412, %v422
      %vm431 = vcmp.eq.s32.totalorder %v413, %v422
      %vm432 = vcmp.eq.s32.totalorder %v414, %v422
      %vm433 = vcmp.eq.s32.totalorder %v415, %v422
      %vm434 = vcmp.eq.s32.totalorder %v416, %v422
      %vm435 = vcmp.eq.s32.totalorder %v417, %v422
      %vm436 = vcmp.eq.s32.totalorder %v418, %v422
      %vm437 = vcmp.eq.s32.totalorder %v419, %v422
      %vm438 = vcmp.eq.s32.totalorder %v420, %v422
      %v439 = vsel %vm423, %v270, 0.0
      %v440 = vsel %vm424, %v271, 0.0
      %v441 = vsel %vm425, %v272, 0.0
      %v442 = vsel %vm426, %v273, 0.0
      %v443 = vsel %vm427, %v274, 0.0
      %v444 = vsel %vm428, %v275, 0.0
      %v445 = vsel %vm429, %v276, 0.0
      %v446 = vsel %vm430, %v277, 0.0
      %v447 = vsel %vm431, %v278, 0.0
      %v448 = vsel %vm432, %v279, 0.0
      %v449 = vsel %vm433, %v280, 0.0
      %v450 = vsel %vm434, %v281, 0.0
      %v451 = vsel %vm435, %v282, 0.0
      %v452 = vsel %vm436, %v283, 0.0
      %v453 = vsel %vm437, %v284, 0.0
      %v454 = vsel %vm438, %v285, 0.0
      %455 = vadd.xlane.f32.xlu0 %v439
      %v456 = vpop.xlane.xlu0 %455
      %457 = vadd.xlane.f32.xlu0 %v440
      %v458 = vpop.xlane.xlu0 %457
      %459 = vadd.xlane.f32.xlu0 %v441
      %v460 = vpop.xlane.xlu0 %459
      %461 = vadd.xlane.f32.xlu0 %v442
      %v462 = vpop.xlane.xlu0 %461
      %463 = vadd.xlane.f32.xlu0 %v443
      %v464 = vpop.xlane.xlu0 %463
      %465 = vadd.xlane.f32.xlu0 %v444
      %v466 = vpop.xlane.xlu0 %465
      %467 = vadd.xlane.f32.xlu0 %v445
      %v468 = vpop.xlane.xlu0 %467
      %469 = vadd.xlane.f32.xlu0 %v446
      %v470 = vpop.xlane.xlu0 %469
      %471 = vadd.xlane.f32.xlu0 %v447
      %v472 = vpop.xlane.xlu0 %471
      %473 = vadd.xlane.f32.xlu0 %v448
      %v474 = vpop.xlane.xlu0 %473
      %475 = vadd.xlane.f32.xlu0 %v449
      %v476 = vpop.xlane.xlu0 %475
      %477 = vadd.xlane.f32.xlu0 %v450
      %v478 = vpop.xlane.xlu0 %477
      %479 = vadd.xlane.f32.xlu0 %v451
      %v480 = vpop.xlane.xlu0 %479
      %481 = vadd.xlane.f32.xlu0 %v452
      %v482 = vpop.xlane.xlu0 %481
      %483 = vadd.xlane.f32.xlu0 %v453
      %v484 = vpop.xlane.xlu0 %483
      %485 = vadd.xlane.f32.xlu0 %v454
      %v486 = vpop.xlane.xlu0 %485
      %v487 = vld [vmem:[#allocation2] sm:$0x1]
      %v488 = vadd.f32 %v286, %v287
      %v489 = vadd.f32 %v488, %v288
      %v490 = vadd.f32 %v489, %v289
      %v491 = vadd.f32 %v490, %v290
      %v492 = vadd.f32 %v491, %v291
      %v493 = vadd.f32 %v492, %v292
      %v494 = vadd.f32 %v493, %v293
      %v495 = vadd.f32 %v494, %v294
      %v496 = vadd.f32 %v495, %v295
      %v497 = vadd.f32 %v496, %v296
      %v498 = vadd.f32 %v497, %v297
      %v499 = vadd.f32 %v498, %v298
      %v500 = vadd.f32 %v499, %v299
      %v501 = vadd.f32 %v500, %v300
      %v502 = vadd.f32 %v501, %v301
      %503 = vadd.xlane.f32.xlu0 %v502
      %v504 = vpop.xlane.xlu0 %503
      %v505 = vrot.slane %v504, 4
      %v506 = vadd.f32 %v504, %v505
      %v507 = vrot.slane %v506, 2
      %v508 = vadd.f32 %v506, %v507
      %v509 = vrot.slane %v508, 1
      %v510 = vadd.f32 %v508, %v509
      %s511 = vtos %v510
      %v512 = vstv %s511
      %v513 = vadd.f32 %v487, %v512
      %vm514 = vcmask 0
      %515 = vst.msk [vmem:[#allocation2] sm:$0x1] %vm514, %v513
      %v516 = vld [vmem:[#allocation4] sm:$0x1]
      %v517 = vsub.f32 %v325, %v456
      %v518 = vsub.f32 %v327, %v458
      %v519 = vsub.f32 %v329, %v460
      %v520 = vsub.f32 %v331, %v462
      %v521 = vsub.f32 %v333, %v464
      %v522 = vsub.f32 %v335, %v466
      %v523 = vsub.f32 %v337, %v468
      %v524 = vsub.f32 %v339, %v470
      %v525 = vsub.f32 %v341, %v472
      %v526 = vsub.f32 %v343, %v474
      %v527 = vsub.f32 %v345, %v476
      %v528 = vsub.f32 %v347, %v478
      %v529 = vsub.f32 %v349, %v480
      %v530 = vsub.f32 %v351, %v482
      %v531 = vsub.f32 %v353, %v484
      %v532 = vsub.f32 %v355, %v486
      %v533 = vmul.f32 %v254, %v517
      %v534 = vmul.f32 %v255, %v518
      %v535 = vmul.f32 %v256, %v519
      %v536 = vmul.f32 %v257, %v520
      %v537 = vmul.f32 %v258, %v521
      %v538 = vmul.f32 %v259, %v522
      %v539 = vmul.f32 %v260, %v523
      %v540 = vmul.f32 %v261, %v524
      %v541 = vmul.f32 %v262, %v525
      %v542 = vmul.f32 %v263, %v526
      %v543 = vmul.f32 %v264, %v527
      %v544 = vmul.f32 %v265, %v528
      %v545 = vmul.f32 %v266, %v529
      %v546 = vmul.f32 %v267, %v530
      %v547 = vmul.f32 %v268, %v531
      %v548 = vmul.f32 %v269, %v532
      %vm549 = vcmask 7168
      %v550 = vsel %vm549, %v533, 0.0
      %v551 = vsel %vm549, %v534, 0.0
      %v552 = vadd.f32 %v550, %v551
      %v553 = vsel %vm549, %v535, 0.0
      %v554 = vadd.f32 %v552, %v553
      %v555 = vsel %vm549, %v536, 0.0
      %v556 = vadd.f32 %v554, %v555
      %v557 = vsel %vm549, %v537, 0.0
      %v558 = vadd.f32 %v556, %v557
      %v559 = vsel %vm549, %v538, 0.0
      %v560 = vadd.f32 %v558, %v559
      %v561 = vsel %vm549, %v539, 0.0
      %v562 = vadd.f32 %v560, %v561
      %v563 = vsel %vm549, %v540, 0.0
      %v564 = vadd.f32 %v562, %v563
      %v565 = vsel %vm549, %v541, 0.0
      %v566 = vadd.f32 %v564, %v565
      %v567 = vsel %vm549, %v542, 0.0
      %v568 = vadd.f32 %v566, %v567
      %v569 = vsel %vm549, %v543, 0.0
      %v570 = vadd.f32 %v568, %v569
      %v571 = vsel %vm549, %v544, 0.0
      %v572 = vadd.f32 %v570, %v571
      %v573 = vsel %vm549, %v545, 0.0
      %v574 = vadd.f32 %v572, %v573
      %v575 = vsel %vm549, %v546, 0.0
      %v576 = vadd.f32 %v574, %v575
      %v577 = vsel %vm549, %v547, 0.0
      %v578 = vadd.f32 %v576, %v577
      %v579 = vsel %vm549, %v548, 0.0
      %v580 = vadd.f32 %v578, %v579
      %581 = vadd.xlane.f32.xlu0 %v580
      %v582 = vpop.xlane.xlu0 %581
      %v583 = vrot.slane %v582, 4
      %v584 = vadd.f32 %v582, %v583
      %v585 = vrot.slane %v584, 2
      %v586 = vadd.f32 %v584, %v585
      %v587 = vrot.slane %v586, 1
      %v588 = vadd.f32 %v586, %v587
      %s589 = vtos %v588
      %v590 = vstv %s589
      %v591 = vadd.f32 %v516, %v590
      %592 = vst.msk [vmem:[#allocation4] sm:$0x1] %vm514, %v591
      %v593 = vld [vmem:[#allocation3] sm:$0x1]
      %v594 = vmul.f32 %v456, %v456
      %v595 = vmul.f32 %v458, %v458
      %v596 = vmul.f32 %v460, %v460
      %v597 = vmul.f32 %v462, %v462
      %v598 = vmul.f32 %v464, %v464
      %v599 = vmul.f32 %v466, %v466
      %v600 = vmul.f32 %v468, %v468
      %v601 = vmul.f32 %v470, %v470
      %v602 = vmul.f32 %v472, %v472
      %v603 = vmul.f32 %v474, %v474
      %v604 = vmul.f32 %v476, %v476
      %v605 = vmul.f32 %v478, %v478
      %v606 = vmul.f32 %v480, %v480
      %v607 = vmul.f32 %v482, %v482
      %v608 = vmul.f32 %v484, %v484
      %v609 = vmul.f32 %v486, %v486
      %v610 = vsub.f32 %v373, %v594
      %v611 = vsub.f32 %v375, %v595
      %v612 = vsub.f32 %v377, %v596
      %v613 = vsub.f32 %v379, %v597
      %v614 = vsub.f32 %v381, %v598
      %v615 = vsub.f32 %v383, %v599
      %v616 = vsub.f32 %v385, %v600
      %v617 = vsub.f32 %v387, %v601
      %v618 = vsub.f32 %v389, %v602
      %v619 = vsub.f32 %v391, %v603
      %v620 = vsub.f32 %v393, %v604
      %v621 = vsub.f32 %v395, %v605
      %v622 = vsub.f32 %v397, %v606
      %v623 = vsub.f32 %v399, %v607
      %v624 = vsub.f32 %v401, %v608
      %v625 = vsub.f32 %v403, %v609
      %v626 = vmul.f32 %v254, %v610
      %v627 = vmul.f32 %v255, %v611
      %v628 = vmul.f32 %v256, %v612
      %v629 = vmul.f32 %v257, %v613
      %v630 = vmul.f32 %v258, %v614
      %v631 = vmul.f32 %v259, %v615
      %v632 = vmul.f32 %v260, %v616
      %v633 = vmul.f32 %v261, %v617
      %v634 = vmul.f32 %v262, %v618
      %v635 = vmul.f32 %v263, %v619
      %v636 = vmul.f32 %v264, %v620
      %v637 = vmul.f32 %v265, %v621
      %v638 = vmul.f32 %v266, %v622
      %v639 = vmul.f32 %v267, %v623
      %v640 = vmul.f32 %v268, %v624
      %v641 = vmul.f32 %v269, %v625
      %v642 = vsel %vm549, %v626, 0.0
      %v643 = vsel %vm549, %v627, 0.0
      %v644 = vadd.f32 %v642, %v643
      %v645 = vsel %vm549, %v628, 0.0
      %v646 = vadd.f32 %v644, %v645
      %v647 = vsel %vm549, %v629, 0.0
      %v648 = vadd.f32 %v646, %v647
      %v649 = vsel %vm549, %v630, 0.0
      %v650 = vadd.f32 %v648, %v649
      %v651 = vsel %vm549, %v631, 0.0
      %v652 = vadd.f32 %v650, %v651
      %v653 = vsel %vm549, %v632, 0.0
      %v654 = vadd.f32 %v652, %v653
      %v655 = vsel %vm549, %v633, 0.0
      %v656 = vadd.f32 %v654, %v655
      %v657 = vsel %vm549, %v634, 0.0
      %v658 = vadd.f32 %v656, %v657
      %v659 = vsel %vm549, %v635, 0.0
      %v660 = vadd.f32 %v658, %v659
      %v661 = vsel %vm549, %v636, 0.0
      %v662 = vadd.f32 %v660, %v661
      %v663 = vsel %vm549, %v637, 0.0
      %v664 = vadd.f32 %v662, %v663
      %v665 = vsel %vm549, %v638, 0.0
      %v666 = vadd.f32 %v664, %v665
      %v667 = vsel %vm549, %v639, 0.0
      %v668 = vadd.f32 %v666, %v667
      %v669 = vsel %vm549, %v640, 0.0
      %v670 = vadd.f32 %v668, %v669
      %v671 = vsel %vm549, %v641, 0.0
      %v672 = vadd.f32 %v670, %v671
      %673 = vadd.xlane.f32.xlu0 %v672
      %v674 = vpop.xlane.xlu0 %673
      %v675 = vrot.slane %v674, 4
      %v676 = vadd.f32 %v674, %v675
      %v677 = vrot.slane %v676, 2
      %v678 = vadd.f32 %v676, %v677
      %v679 = vrot.slane %v678, 1
      %v680 = vadd.f32 %v678, %v679
      %s681 = vtos %v680
      %v682 = vstv %s681
      %v683 = vadd.f32 %v593, %v682
      %684 = vst.msk [vmem:[#allocation3] sm:$0x1] %vm514, %v683
      // Predicated region
      $region37: #{tpu_custom_call.1} parent=31 // pred_check
        %p685 = pneg %p245
      $region38: #{tpu_custom_call.1} parent=31 // pred_check_branch
        %687 = sbr.rel (%p685) target = $region40
      $region39: #{tpu_custom_call.1} parent=31 // pred_region
        %vm688 = vcmask 1040384
        %v689 = vsel %vm688, %v253, 0.0
        %690 = vadd.xlane.f32.xlu0 %v689
        %v691 = vpop.xlane.xlu0 %690
        %v692 = vrot.slane %v691, 4
        %v693 = vadd.f32 %v691, %v692
        %v694 = vrot.slane %v693, 2
        %v695 = vadd.f32 %v693, %v694
        %v696 = vrot.slane %v695, 1
        %v697 = vadd.f32 %v695, %v696
        %s698 = vtos %v697
        %v699 = vstv %s698
        %v700 = vmul.f32 %v699, %v699
        %v701 = vsub.f32 %v700, %v699
        %v702 = vld [vmem:[#allocation2] sm:$0x1]
        %v703 = vld [vmem:[#allocation3] sm:$0x1]
        %v704 = vld [vmem:[#allocation4] sm:$0x1]
        %v705 = vmul.f32 %v704, 2.0
        %v706 = vsub.f32 %v703, %v705
        %v707 = vadd.f32 %v706, %v701
        %v708 = vsub.f32 %v702, %v703
        %v709 = vsub.f32 16384.0, %v701
        %v710 = vsub.f32 %v701, 1.0
        %v711 = vmax.f32 %v710, 0.0
        %v712 = vadd.f32 %v711, 1.0
        %v713 = vrcp.pop %v712
        %v714 = vmul.f32 %v707, %v713
        %v715 = vsub.f32 %v709, 1.0
        %v716 = vmax.f32 %v715, 0.0
        %v717 = vadd.f32 %v716, 1.0
        %v718 = vrcp.pop %v717
        %v719 = vmul.f32 %v708, %v718
        %v720 = vmul.f32 %v714, 0.5
        %v721 = vmul.f32 %v719, 0.5
        %v722 = vadd.f32 %v720, %v721
        %723 = vst.msk [vmem:[%s244] sm:$0x1] %vm514, %v722
      $region40: #{tpu_custom_call.1} parent=31 // pred_fallthru
        _
      %p724 = scmp.lt.s32.totalorder %s18, 1
      %s725 = scalar_select %p724, %s18, 1
      %s726 = scalar_lea.vmem %s3, %s725
      // Predicated region
      $region41: #{tpu_custom_call.1} parent=31 // pred_check
        %p727 = pneg %p126
      $region42: #{tpu_custom_call.1} parent=31 // pred_check_branch
        %729 = sbr.rel (%p727) target = $region44
      $region43: #{tpu_custom_call.1} parent=31 // pred_region
        _
      $region44: #{tpu_custom_call.1} parent=31 // pred_fallthru
        _
    $region32: #{tpu_custom_call.1} parent=5 // pred_fallthru
      _
    %p730 = scmp.le.s32.totalorder 2, %s9
    // Predicated region
    $region45: #{tpu_custom_call.1} parent=5 // pred_check
      %p731 = pneg %p730
    $region46: #{tpu_custom_call.1} parent=5 // pred_check_branch
      %733 = sbr.rel (%p731) target = $region48
    $region47: #{tpu_custom_call.1} parent=5 // pred_region
      %s734 = ssub.s32 %s9, 2
      // Predicated region
      $region49: #{tpu_custom_call.1} parent=47 // pred_check
        %p735 = pneg %p132
      $region50: #{tpu_custom_call.1} parent=47 // pred_check_branch
        %737 = sbr.rel (%p735) target = $region52
      $region51: #{tpu_custom_call.1} parent=47 // pred_region
        %p738 = scmp.lt.s32.totalorder %s20, 1
        %s739 = scalar_select %p738, %s20, 1
        %s740 = scalar_lea.vmem %s3, %s739
      $region52: #{tpu_custom_call.1} parent=47 // pred_fallthru
        _
    $region48: #{tpu_custom_call.1} parent=5 // pred_fallthru
      _
  $region6: #{tpu_custom_call.1} parent=0 // loop_footer
    %s13 = sadd.s32 1, %s9
  $region7: #{tpu_custom_call.1} parent=0 // loop_footer_branch
    %8 = sbr.rel target = $region3
  $region8: #{tpu_custom_call.1} parent=0 // loop_exit
    _

</llo_original>
